<compile_context>
chip_gen: v7x
topology: tpu7x:2x2x1
jax: 0.10.0
libtpu: 0.0.40
codegen_flags: <defaults>
</compile_context>

<pallas_src>
import functools

import jax
import jax.numpy as jnp
from jax.experimental import pallas as pl
from jax.experimental.pallas import tpu as pltpu

_LANES = 128


def _round_up(n, m):
    return ((n + m - 1) // m) * m


def _leaky_relu(v, slope=0.2):
    return jnp.where(v > 0, v, slope * v)


# --------------------------------------------------------------------------
# kernel
# --------------------------------------------------------------------------
def vae_kernel(x_ref, eps_ref, w_ref, b_ref, out_ref, *, cfg):
    input_dim = cfg["input_dim"]
    emb = cfg["embedding_dim"]
    x_rows = cfg["x_rows"]
    hid_p = cfg["hid_p"]
    lat_p = cfg["lat_p"]
    emb2_p = cfg["emb2_p"]
    din_p = cfg["din_p"]
    z_rows = cfg["z_rows"]
    out_w = cfg["out_w"]
    r_w1, r_w2, r_wmv, r_wd1, r_wd2, r_wd3 = cfg["w_rows"]
    c_b1, c_b2, c_bmv, c_bd1, c_bd2, c_bd3 = cfg["b_cols"]

    tb = x_ref.shape[0]
    w_dtype = w_ref.dtype

    def dense(act, r, k, c, n):
        # act: (tb, k) f32 ; weight rows r:r+k lanes 0:n ; bias lanes c:c+n
        w = w_ref[r:r + k, :n]
        b = b_ref[0:1, c:c + n]
        return jnp.dot(act.astype(w_dtype), w,
                       preferred_element_type=jnp.float32) + b

    # ---- encoder ---------------------------------------------------------
    x = x_ref[...]                                            # (tb, input_dim)
    if x_rows != input_dim:  # static branch; not taken for 8-aligned dims
        x = jnp.concatenate(
            [x, jnp.zeros((tb, x_rows - input_dim), x.dtype)], axis=1)
    h = _leaky_relu(dense(x, r_w1, x_rows, c_b1, hid_p))      # (tb, hid_p)
    h = _leaky_relu(dense(h, r_w2, hid_p, c_b2, lat_p))       # (tb, lat_p)

    # ---- fused mean|logvar head: one 128-lane matmul, compact packing -----
    ml = dense(h, r_wmv, lat_p, c_bmv, emb2_p)                # (tb, emb2_p)
    mean = ml[:, :emb]                                        # (tb, emb)
    logvar = ml[:, emb:2 * emb]                               # (tb, emb)

    # ---- reparameterization (module: z = mean + log_var * eps) ------------
    z = mean + logvar * eps_ref[...]                          # (tb, emb)
    z = jnp.concatenate(                                      # pad to K=z_rows
        [z, jnp.zeros((tb, z_rows - emb), jnp.float32)], axis=1)

    # ---- decoder -----------------------------------------------------------
    d = _leaky_relu(dense(z, r_wd1, z_rows, c_bd1, lat_p))
    d = _leaky_relu(dense(d, r_wd2, lat_p, c_bd2, hid_p))
    logits = dense(d, r_wd3, hid_p, c_bd3, din_p)             # (tb, din_p)

    # ---- single lane-dense 128-multiple output slab, one full-width store --
    x_hat = jax.nn.sigmoid(logits[:, :input_dim])             # (tb, input_dim)
    head = ml[:, :2 * emb]                                    # [mean | logvar]
    pad = out_w - input_dim - 2 * emb
    pieces = [x_hat, head]
    if pad > 0:
        pieces.append(jnp.zeros((tb, pad), jnp.float32))
    out_ref[...] = jnp.concatenate(pieces, axis=1)            # (tb, out_w)


# --------------------------------------------------------------------------
# parameter packing (done once, outside the kernel)
# --------------------------------------------------------------------------
def pack_vae_params(params, input_dim, hidden_dim, latent_dim, embedding_dim,
                    param_dtype=jnp.float32):
    assert 2 * embedding_dim <= _LANES, "compact head needs 2*embedding_dim <= 128"

    hid_p = _round_up(hidden_dim, _LANES)
    lat_p = _round_up(latent_dim, _LANES)
    emb2_p = _round_up(2 * embedding_dim, _LANES)
    din_p = _round_up(input_dim, _LANES)
    z_rows = _round_up(embedding_dim, _LANES)
    x_rows = _round_up(input_dim, 8)
    w_lanes = max(hid_p, lat_p, emb2_p, din_p)

    # weight-slab row offsets (all sublane-aligned)
    r_w1 = 0
    r_w2 = r_w1 + x_rows
    r_wmv = r_w2 + hid_p
    r_wd1 = r_wmv + lat_p
    r_wd2 = r_wd1 + z_rows
    r_wd3 = r_wd2 + lat_p
    total_rows = r_wd3 + hid_p

    wslab = jnp.zeros((total_rows, w_lanes), param_dtype)

    def put_w(slab, r, w):
        return slab.at[r:r + w.shape[0], :w.shape[1]].set(w.astype(param_dtype))

    wslab = put_w(wslab, r_w1, params["w1"])            # (input_dim, hidden_dim)
    wslab = put_w(wslab, r_w2, params["w2"])            # (hidden_dim, latent_dim)
    wslab = put_w(wslab, r_wmv, params["wm"])           # mean head -> lanes [0:emb)
    wslab = wslab.at[r_wmv:r_wmv + latent_dim,
                     embedding_dim:2 * embedding_dim].set(
        params["wv"].astype(param_dtype))               # logvar head -> [emb:2emb)
    wslab = put_w(wslab, r_wd1, params["wd1"])          # (embedding_dim, latent_dim)
    wslab = put_w(wslab, r_wd2, params["wd2"])          # (latent_dim, hidden_dim)
    wslab = put_w(wslab, r_wd3, params["wd3"])          # (hidden_dim, input_dim)

    # bias-slab lane offsets (all 128-multiples)
    c_b1 = 0
    c_b2 = c_b1 + hid_p
    c_bmv = c_b2 + lat_p
    c_bd1 = c_bmv + emb2_p
    c_bd2 = c_bd1 + lat_p
    c_bd3 = c_bd2 + hid_p
    total_cols = c_bd3 + din_p

    bslab = jnp.zeros((8, total_cols), param_dtype)

    def put_b(slab, c, b):
        v = b.reshape(-1).astype(param_dtype)
        return slab.at[0, c:c + v.shape[0]].set(v)

    bslab = put_b(bslab, c_b1, params["b1"])
    bslab = put_b(bslab, c_b2, params["b2"])
    bslab = put_b(bslab, c_bmv, params["bm"])
    bslab = bslab.at[0, c_bmv + embedding_dim:
                        c_bmv + 2 * embedding_dim].set(
        params["bv"].reshape(-1).astype(param_dtype))
    bslab = put_b(bslab, c_bd1, params["bd1"])
    bslab = put_b(bslab, c_bd2, params["bd2"])
    bslab = put_b(bslab, c_bd3, params["bd3"])

    out_w = _round_up(input_dim + 2 * embedding_dim, _LANES)

    cfg = dict(
        input_dim=input_dim, embedding_dim=embedding_dim,
        x_rows=x_rows, hid_p=hid_p, lat_p=lat_p, emb2_p=emb2_p, din_p=din_p,
        z_rows=z_rows, out_w=out_w,
        w_rows=(r_w1, r_w2, r_wmv, r_wd1, r_wd2, r_wd3),
        b_cols=(c_b1, c_b2, c_bmv, c_bd1, c_bd2, c_bd3),
    )
    return {"wslab": wslab, "bslab": bslab, "cfg": cfg}


# --------------------------------------------------------------------------
# wrapper
# --------------------------------------------------------------------------
def _pick_tile(batch, max_tile=1024):
    """Batch tile: multiple of 8, up to max_tile, minimizing padded rows."""
    b8 = _round_up(max(batch, 1), 8)
    if b8 <= max_tile:
        return b8                      # single tile, no padding beyond 8-row align
    best_t, best_pad = 128, None
    for t in (1024, 512, 256, 128):
        if t > max_tile:
            continue
        pad = _round_up(b8, t) - b8
        if best_pad is None or pad < best_pad:
            best_t, best_pad = t, pad
    return best_t


def _batch_semantics(num_tiles):
    """Use CORE_PARALLEL on v7x (2 TCs/chip) when the grid splits evenly across
    both cores; plain 'parallel' elsewhere (no-op on 1-TC chips but harmless)."""
    kind = ""
    try:
        kind = jax.devices()[0].device_kind.lower()
    except Exception:
        pass
    core_parallel = getattr(pltpu, "CORE_PARALLEL", None)
    if (core_parallel is not None and num_tiles >= 2 and num_tiles % 2 == 0
            and ("v7" in kind or "tpu7" in kind or "7x" in kind)):
        return (core_parallel,)
    return ("parallel",)


def vae_forward(x, eps, packed, max_tile=1024):
    """Fused VAE forward. Batch is tiled over a 1-D grid; x/eps/out are
    lane-dense (no wrapper lane padding); weights/biases stay VMEM-resident."""
    cfg = packed["cfg"]
    input_dim = cfg["input_dim"]
    emb = cfg["embedding_dim"]
    out_w = cfg["out_w"]

    x = x.astype(jnp.float32)
    eps = eps.astype(jnp.float32)

    B = x.shape[0]
    tb = _pick_tile(B, max_tile)
    b_pad = _round_up(B, tb)
    if b_pad != B:                      # pad batch ROWS only when needed
        x = jnp.pad(x, ((0, b_pad - B), (0, 0)))
        eps = jnp.pad(eps, ((0, b_pad - B), (0, 0)))
    num_tiles = b_pad // tb

    wslab, bslab = packed["wslab"], packed["bslab"]
    kernel = functools.partial(vae_kernel, cfg=cfg)

    out = pl.pallas_call(
        kernel,
        grid=(num_tiles,),
        in_specs=[
            pl.BlockSpec((tb, input_dim), lambda i: (i, 0)),   # x   (lane-dense, tiled)
            pl.BlockSpec((tb, emb), lambda i: (i, 0)),         # eps (lane-dense, tiled)
            pl.BlockSpec(wslab.shape, lambda i: (0, 0)),       # weights (VMEM resident)
            pl.BlockSpec(bslab.shape, lambda i: (0, 0)),       # biases  (VMEM resident)
        ],
        out_specs=pl.BlockSpec((tb, out_w), lambda i: (i, 0)),
        out_shape=jax.ShapeDtypeStruct((b_pad, out_w), jnp.float32),
        compiler_params=pltpu.CompilerParams(
            dimension_semantics=_batch_semantics(num_tiles)),
    )(x, eps, wslab, bslab)

    x_hat = out[:B, :input_dim]
    mean = out[:B, input_dim:input_dim + emb]
    logvar = out[:B, input_dim + emb:input_dim + 2 * emb]
    return x_hat, mean, logvar


# --------------------------------------------------------------------------
# init + pure-JAX reference
# --------------------------------------------------------------------------
def init_linear(key, fan_in, fan_out):
    """PyTorch-style init: U(-1/sqrt(fan_in), 1/sqrt(fan_in))."""
    kw, kb = jax.random.split(key)
    bound = 1.0 / jnp.sqrt(jnp.float32(fan_in))
    w = jax.random.uniform(kw, (fan_in, fan_out), jnp.float32, -bound, bound)
    b = jax.random.uniform(kb, (1, fan_out), jnp.float32, -bound, bound)
    return w, b


def init_vae_params(key, input_dim, hidden_dim, latent_dim, embedding_dim):
    keys = jax.random.split(key, 7)
    params = {}
    params["w1"], params["b1"] = init_linear(keys[0], input_dim, hidden_dim)
    params["w2"], params["b2"] = init_linear(keys[1], hidden_dim, latent_dim)
    params["wm"], params["bm"] = init_linear(keys[2], latent_dim, embedding_dim)
    params["wv"], params["bv"] = init_linear(keys[3], latent_dim, embedding_dim)
    params["wd1"], params["bd1"] = init_linear(keys[4], embedding_dim, latent_dim)
    params["wd2"], params["bd2"] = init_linear(keys[5], latent_dim, hidden_dim)
    params["wd3"], params["bd3"] = init_linear(keys[6], hidden_dim, input_dim)
    return params


def vae_reference(x, eps, params):
    lrelu = lambda v: jnp.where(v > 0, v, 0.2 * v)
    hi = jax.lax.Precision.HIGHEST
    h = lrelu(jnp.dot(x, params["w1"], precision=hi) + params["b1"])
    h = lrelu(jnp.dot(h, params["w2"], precision=hi) + params["b2"])
    mean = jnp.dot(h, params["wm"], precision=hi) + params["bm"]
    logvar = jnp.dot(h, params["wv"], precision=hi) + params["bv"]
    z = mean + logvar * eps
    d = lrelu(jnp.dot(z, params["wd1"], precision=hi) + params["bd1"])
    d = lrelu(jnp.dot(d, params["wd2"], precision=hi) + params["bd2"])
    x_hat = jax.nn.sigmoid(jnp.dot(d, params["wd3"], precision=hi) + params["bd3"])
    return x_hat, mean, logvar


if __name__ == "__main__":
    # Small shapes consistent with the module's forward.
    batch = 8
    input_dim = 64
    hidden_dim = 32
    latent_dim = 16
    embedding_dim = 2

    root = jax.random.PRNGKey(0)
    k_params, k_x, k_eps = jax.random.split(root, 3)

    params = init_vae_params(k_params, input_dim, hidden_dim, latent_dim,
                             embedding_dim)
    packed = pack_vae_params(params, input_dim, hidden_dim, latent_dim,
                             embedding_dim)

    x = jax.random.uniform(k_x, (batch, input_dim), jnp.float32)
    # epsilon ~ N(0,1): torch.randn_like hoisted out of the module, passed explicitly
    eps = jax.random.normal(k_eps, (batch, embedding_dim), jnp.float32)

    x_hat, mean, logvar = jax.block_until_ready(vae_forward(x, eps, packed))

    # correctness check vs pure-JAX reference (unpacked params)
    x_hat_ref, mean_ref, logvar_ref = vae_reference(x, eps, params)
    assert x_hat.shape == (batch, input_dim)
    assert mean.shape == (batch, embedding_dim)
    assert logvar.shape == (batch, embedding_dim)
    assert jnp.allclose(x_hat, x_hat_ref, atol=1e-5, rtol=1e-5)
    assert jnp.allclose(mean, mean_ref, atol=1e-5, rtol=1e-5)
    assert jnp.allclose(logvar, logvar_ref, atol=1e-5, rtol=1e-5)

    print("KERNEL_OK")
</pallas_src>

<mosaic_0001>
module attributes {stable_mosaic.version = 11 : i64} {
  func.func @vae_kernel(%arg0: i32, %arg1: memref<8x64xf32, #tpu.memory_space<vmem>>, %arg2: memref<8x2xf32, #tpu.memory_space<vmem>>, %arg3: memref<704x128xf32, #tpu.memory_space<vmem>>, %arg4: memref<8x768xf32, #tpu.memory_space<vmem>>, %arg5: memref<8x128xf32, #tpu.memory_space<vmem>>) attributes {dimension_semantics = [#tpu.dimension_semantics<parallel>], iteration_bounds = array<i64: 1>, scalar_prefetch = 0 : i64, scratch_operands = 0 : i64, tpu.core_type = #tpu.core_type<tc>, window_params = [{transform_indices = @transform_0, window_bounds = array<i64: 8, 64>}, {transform_indices = @transform_1, window_bounds = array<i64: 8, 2>}, {pipeline_mode = #tpu.pipeline_mode<synchronous>, transform_indices = @transform_2, window_bounds = array<i64: 704, 128>}, {pipeline_mode = #tpu.pipeline_mode<synchronous>, transform_indices = @transform_3, window_bounds = array<i64: 8, 768>}, {transform_indices = @transform_4, window_bounds = array<i64: 8, 128>}]} {
    %c0 = arith.constant 0 : index
    %c0_0 = arith.constant 0 : index
    %0 = vector.load %arg1[%c0, %c0_0] : memref<8x64xf32, #tpu.memory_space<vmem>>, vector<8x64xf32>
    %c0_1 = arith.constant 0 : index
    %c0_2 = arith.constant 0 : index
    %1 = vector.load %arg3[%c0_1, %c0_2] : memref<704x128xf32, #tpu.memory_space<vmem>>, vector<64x128xf32>
    %c0_3 = arith.constant 0 : index
    %c0_4 = arith.constant 0 : index
    %2 = vector.load %arg4[%c0_3, %c0_4] : memref<8x768xf32, #tpu.memory_space<vmem>>, vector<1x128xf32>
    %cst = arith.constant dense<0.000000e+00> : vector<8x128xf32>
    %3 = tpu.matmul %0, %1, %cst {dimension_numbers = #tpu.dot_dimension_numbers<[1], [0], [0], [1], [0, 0, 1, 1], [], []>} : vector<8x64xf32>, vector<64x128xf32>, vector<8x128xf32> -> vector<8x128xf32>
    %4 = vector.broadcast %2 : vector<1x128xf32> to vector<8x128xf32>
    %5 = arith.addf %3, %4 : vector<8x128xf32>
    %cst_5 = arith.constant 0.000000e+00 : f32
    %6 = vector.broadcast %cst_5 : f32 to vector<8x128xf32>
    %7 = arith.cmpf ogt, %5, %6 : vector<8x128xf32>
    %cst_6 = arith.constant 2.000000e-01 : f32
    %8 = vector.broadcast %cst_6 : f32 to vector<8x128xf32>
    %9 = arith.mulf %8, %5 : vector<8x128xf32>
    %10 = arith.select %7, %5, %9 : vector<8x128xi1>, vector<8x128xf32>
    %c64 = arith.constant 64 : index
    %c0_7 = arith.constant 0 : index
    %11 = vector.load %arg3[%c64, %c0_7] : memref<704x128xf32, #tpu.memory_space<vmem>>, vector<128x128xf32>
    %c0_8 = arith.constant 0 : index
    %c128 = arith.constant 128 : index
    %12 = vector.load %arg4[%c0_8, %c128] : memref<8x768xf32, #tpu.memory_space<vmem>>, vector<1x128xf32>
    %cst_9 = arith.constant dense<0.000000e+00> : vector<8x128xf32>
    %13 = tpu.matmul %10, %11, %cst_9 {dimension_numbers = #tpu.dot_dimension_numbers<[1], [0], [0], [1], [0, 0, 1, 1], [], []>} : vector<8x128xf32>, vector<128x128xf32>, vector<8x128xf32> -> vector<8x128xf32>
    %14 = vector.broadcast %12 : vector<1x128xf32> to vector<8x128xf32>
    %15 = arith.addf %13, %14 : vector<8x128xf32>
    %cst_10 = arith.constant 0.000000e+00 : f32
    %16 = vector.broadcast %cst_10 : f32 to vector<8x128xf32>
    %17 = arith.cmpf ogt, %15, %16 : vector<8x128xf32>
    %cst_11 = arith.constant 2.000000e-01 : f32
    %18 = vector.broadcast %cst_11 : f32 to vector<8x128xf32>
    %19 = arith.mulf %18, %15 : vector<8x128xf32>
    %20 = arith.select %17, %15, %19 : vector<8x128xi1>, vector<8x128xf32>
    %c192 = arith.constant 192 : index
    %c0_12 = arith.constant 0 : index
    %21 = vector.load %arg3[%c192, %c0_12] : memref<704x128xf32, #tpu.memory_space<vmem>>, vector<128x128xf32>
    %c0_13 = arith.constant 0 : index
    %c256 = arith.constant 256 : index
    %22 = vector.load %arg4[%c0_13, %c256] : memref<8x768xf32, #tpu.memory_space<vmem>>, vector<1x128xf32>
    %cst_14 = arith.constant dense<0.000000e+00> : vector<8x128xf32>
    %23 = tpu.matmul %20, %21, %cst_14 {dimension_numbers = #tpu.dot_dimension_numbers<[1], [0], [0], [1], [0, 0, 1, 1], [], []>} : vector<8x128xf32>, vector<128x128xf32>, vector<8x128xf32> -> vector<8x128xf32>
    %24 = vector.broadcast %22 : vector<1x128xf32> to vector<8x128xf32>
    %25 = arith.addf %23, %24 : vector<8x128xf32>
    %26 = vector.extract_strided_slice %25 {offsets = [0, 0], sizes = [8, 2], strides = [1, 1]} : vector<8x128xf32> to vector<8x2xf32>
    %27 = vector.extract_strided_slice %25 {offsets = [0, 2], sizes = [8, 2], strides = [1, 1]} : vector<8x128xf32> to vector<8x2xf32>
    %c0_15 = arith.constant 0 : index
    %c0_16 = arith.constant 0 : index
    %28 = vector.load %arg2[%c0_15, %c0_16] : memref<8x2xf32, #tpu.memory_space<vmem>>, vector<8x2xf32>
    %29 = arith.mulf %27, %28 : vector<8x2xf32>
    %30 = arith.addf %26, %29 : vector<8x2xf32>
    %cst_17 = arith.constant 0.000000e+00 : f32
    %31 = vector.broadcast %cst_17 : f32 to vector<8x126xf32>
    %32 = tpu.concatenate %30, %31 in 1 : vector<8x2xf32>, vector<8x126xf32> -> vector<8x128xf32>
    %c320 = arith.constant 320 : index
    %c0_18 = arith.constant 0 : index
    %33 = vector.load %arg3[%c320, %c0_18] : memref<704x128xf32, #tpu.memory_space<vmem>>, vector<128x128xf32>
    %c0_19 = arith.constant 0 : index
    %c384 = arith.constant 384 : index
    %34 = vector.load %arg4[%c0_19, %c384] : memref<8x768xf32, #tpu.memory_space<vmem>>, vector<1x128xf32>
    %cst_20 = arith.constant dense<0.000000e+00> : vector<8x128xf32>
    %35 = tpu.matmul %32, %33, %cst_20 {dimension_numbers = #tpu.dot_dimension_numbers<[1], [0], [0], [1], [0, 0, 1, 1], [], []>} : vector<8x128xf32>, vector<128x128xf32>, vector<8x128xf32> -> vector<8x128xf32>
    %36 = vector.broadcast %34 : vector<1x128xf32> to vector<8x128xf32>
    %37 = arith.addf %35, %36 : vector<8x128xf32>
    %cst_21 = arith.constant 0.000000e+00 : f32
    %38 = vector.broadcast %cst_21 : f32 to vector<8x128xf32>
    %39 = arith.cmpf ogt, %37, %38 : vector<8x128xf32>
    %cst_22 = arith.constant 2.000000e-01 : f32
    %40 = vector.broadcast %cst_22 : f32 to vector<8x128xf32>
    %41 = arith.mulf %40, %37 : vector<8x128xf32>
    %42 = arith.select %39, %37, %41 : vector<8x128xi1>, vector<8x128xf32>
    %c448 = arith.constant 448 : index
    %c0_23 = arith.constant 0 : index
    %43 = vector.load %arg3[%c448, %c0_23] : memref<704x128xf32, #tpu.memory_space<vmem>>, vector<128x128xf32>
    %c0_24 = arith.constant 0 : index
    %c512 = arith.constant 512 : index
    %44 = vector.load %arg4[%c0_24, %c512] : memref<8x768xf32, #tpu.memory_space<vmem>>, vector<1x128xf32>
    %cst_25 = arith.constant dense<0.000000e+00> : vector<8x128xf32>
    %45 = tpu.matmul %42, %43, %cst_25 {dimension_numbers = #tpu.dot_dimension_numbers<[1], [0], [0], [1], [0, 0, 1, 1], [], []>} : vector<8x128xf32>, vector<128x128xf32>, vector<8x128xf32> -> vector<8x128xf32>
    %46 = vector.broadcast %44 : vector<1x128xf32> to vector<8x128xf32>
    %47 = arith.addf %45, %46 : vector<8x128xf32>
    %cst_26 = arith.constant 0.000000e+00 : f32
    %48 = vector.broadcast %cst_26 : f32 to vector<8x128xf32>
    %49 = arith.cmpf ogt, %47, %48 : vector<8x128xf32>
    %cst_27 = arith.constant 2.000000e-01 : f32
    %50 = vector.broadcast %cst_27 : f32 to vector<8x128xf32>
    %51 = arith.mulf %50, %47 : vector<8x128xf32>
    %52 = arith.select %49, %47, %51 : vector<8x128xi1>, vector<8x128xf32>
    %c576 = arith.constant 576 : index
    %c0_28 = arith.constant 0 : index
    %53 = vector.load %arg3[%c576, %c0_28] : memref<704x128xf32, #tpu.memory_space<vmem>>, vector<128x128xf32>
    %c0_29 = arith.constant 0 : index
    %c640 = arith.constant 640 : index
    %54 = vector.load %arg4[%c0_29, %c640] : memref<8x768xf32, #tpu.memory_space<vmem>>, vector<1x128xf32>
    %cst_30 = arith.constant dense<0.000000e+00> : vector<8x128xf32>
    %55 = tpu.matmul %52, %53, %cst_30 {dimension_numbers = #tpu.dot_dimension_numbers<[1], [0], [0], [1], [0, 0, 1, 1], [], []>} : vector<8x128xf32>, vector<128x128xf32>, vector<8x128xf32> -> vector<8x128xf32>
    %56 = vector.broadcast %54 : vector<1x128xf32> to vector<8x128xf32>
    %57 = arith.addf %55, %56 : vector<8x128xf32>
    %58 = vector.extract_strided_slice %57 {offsets = [0, 0], sizes = [8, 64], strides = [1, 1]} : vector<8x128xf32> to vector<8x64xf32>
    %59 = arith.negf %58 : vector<8x64xf32>
    %60 = math.exp %59 : vector<8x64xf32>
    %cst_31 = arith.constant 1.000000e+00 : f32
    %61 = vector.broadcast %cst_31 : f32 to vector<8x64xf32>
    %62 = arith.addf %61, %60 : vector<8x64xf32>
    %63 = arith.divf %61, %62 : vector<8x64xf32>
    %64 = vector.extract_strided_slice %25 {offsets = [0, 0], sizes = [8, 4], strides = [1, 1]} : vector<8x128xf32> to vector<8x4xf32>
    %cst_32 = arith.constant 0.000000e+00 : f32
    %65 = vector.broadcast %cst_32 : f32 to vector<8x60xf32>
    %66 = tpu.concatenate %63, %64, %65 in 1 : vector<8x64xf32>, vector<8x4xf32>, vector<8x60xf32> -> vector<8x128xf32>
    %c0_33 = arith.constant 0 : index
    %c0_34 = arith.constant 0 : index
    %67 = vector.load %arg5[%c0_33, %c0_34] : memref<8x128xf32, #tpu.memory_space<vmem>>, vector<8x128xf32>
    tpu.vector_store %arg5[%c0_33, %c0_34], %66 {strides = array<i32>} : memref<8x128xf32, #tpu.memory_space<vmem>>, vector<8x128xf32>,
    return
  }
  func.func @transform_0(%arg0: i32) -> (i32, i32) {
    %c0_i32 = arith.constant 0 : i32
    %c0_i32_0 = arith.constant 0 : i32
    return %arg0, %c0_i32 : i32, i32
  }
  func.func @transform_1(%arg0: i32) -> (i32, i32) {
    %c0_i32 = arith.constant 0 : i32
    %c0_i32_0 = arith.constant 0 : i32
    return %arg0, %c0_i32 : i32, i32
  }
  func.func @transform_2(%arg0: i32) -> (i32, i32) {
    %c0_i32 = arith.constant 0 : i32
    %c0_i32_0 = arith.constant 0 : i32
    %c0_i32_1 = arith.constant 0 : i32
    return %c0_i32, %c0_i32_0 : i32, i32
  }
  func.func @transform_3(%arg0: i32) -> (i32, i32) {
    %c0_i32 = arith.constant 0 : i32
    %c0_i32_0 = arith.constant 0 : i32
    %c0_i32_1 = arith.constant 0 : i32
    return %c0_i32, %c0_i32_0 : i32, i32
  }
  func.func @transform_4(%arg0: i32) -> (i32, i32) {
    %c0_i32 = arith.constant 0 : i32
    %c0_i32_0 = arith.constant 0 : i32
    return %arg0, %c0_i32 : i32, i32
  }
}

</mosaic_0001>

<llo_original>
// kernel: tpu_custom_call.1
$region0: #{tpu_custom_call.1}
  #allocation0 [shape = 'u32[]', space=smem, size = 0x4, offset = 0x4, fixed_abs, tag = 'smem constant byte address 0x4 - core index']
  #allocation1 [shape = 'u32[144,128]{1,0:T(1,128)}', space=vmem, size = 0x12000, scoped, tag = 'internal scratch']
  %s0 = inlined_call_operand.vmem [shape: f32[8,64], index: 0, kind: input, shape index: {}]
  %s1 = inlined_call_operand.vmem [shape: f32[8,2], index: 1, kind: input, shape index: {}]
  %s2 = inlined_call_operand.hbm [shape: f32[704,128], index: 2, kind: input, shape index: {}]
  %s3 = inlined_call_operand.hbm [shape: f32[8,768], index: 3, kind: input, shape index: {}]
  %s4 = inlined_call_operand.hbm [shape: f32[8,128], index: 4, kind: output, shape index: {}]
  %s5 = sld [smem:[#allocation0]]
  $region34: #{tpu_custom_call.1} parent=0
    _
  %s7 = ssub.s32 1, %s5
  %s8 = scalar_select 0, %s7, %s5
  $region1: #{tpu_custom_call.1} parent=0
    #allocation2 [shape = 'u8[360448]{0}', space=vmem, size = 0x58000, scoped, tag = 'input window, operand 2, single buffered']
    #allocation3 [shape = 's32[1]{0}', space=sflag, size = 0x4, scoped, tag = 'scoped memory for tpu_custom_call.1']
    #allocation4 [shape = 's32[1]{0}', space=sflag, size = 0x4, scoped, tag = 'scoped memory for tpu_custom_call.1']
    #allocation5 [shape = 'u8[24576]{0}', space=vmem, size = 0x6000, scoped, tag = 'input window, operand 3, single buffered']
    #allocation6 [shape = 's32[1]{0}', space=sflag, size = 0x4, scoped, tag = 'scoped memory for tpu_custom_call.1']
    #allocation7 [shape = 'u8[4096]{0}', space=vmem, size = 0x1000, scoped, tag = 'output window, operand 0, single buffered']
    %9 = vsyncpa [#allocation3], 0
    %10 = vsyncpa [#allocation6], 0
    %11 = vsyncpa [#allocation4], 0
    // Predicated region
    $region2: #{tpu_custom_call.1} parent=1 // pred_check
      _
    $region3: #{tpu_custom_call.1} parent=1 // pred_check_branch
      %13 = sbr.rel (0) target = $region5
    $region4: #{tpu_custom_call.1} parent=1 // pred_region
      _
    $region5: #{tpu_custom_call.1} parent=1 // pred_fallthru
      _
    // Predicated region
    $region6: #{tpu_custom_call.1} parent=1 // pred_check
      _
    $region7: #{tpu_custom_call.1} parent=1 // pred_check_branch
      %15 = sbr.rel (0) target = $region9
    $region8: #{tpu_custom_call.1} parent=1 // pred_region
      _
    $region9: #{tpu_custom_call.1} parent=1 // pred_fallthru
      _
    // Predicated region
    $region10: #{tpu_custom_call.1} parent=1 // pred_check
      _
    $region11: #{tpu_custom_call.1} parent=1 // pred_check_branch
      %17 = sbr.rel (0) target = $region13
    $region12: #{tpu_custom_call.1} parent=1 // pred_region
      %s19 = ssub.s32 11264, 11264
      %20 = vsyncadd [#allocation3], %s19
      %s21 = sshll.u32 [#allocation2], 4
      %s22 = int_to_ptr.vmem [resolvable:$true] %s21
      %27 = dma.hbm_to_vmem [thread:$0]  %s2, 11264, %s22, [#allocation3], 128, 128, 8
    $region13: #{tpu_custom_call.1} parent=1 // pred_fallthru
      _
    // Predicated region
    $region14: #{tpu_custom_call.1} parent=1 // pred_check
      _
    $region15: #{tpu_custom_call.1} parent=1 // pred_check_branch
      %29 = sbr.rel (0) target = $region17
    $region16: #{tpu_custom_call.1} parent=1 // pred_region
      %s31 = ssub.s32 768, 768
      %32 = vsyncadd [#allocation6], %s31
      %s34 = sshll.u32 [#allocation5], 4
      %s35 = int_to_ptr.vmem [resolvable:$true] %s34
      %37 = dma.hbm_to_vmem [thread:$0]  %s3, 768, %s35, [#allocation6]
    $region17: #{tpu_custom_call.1} parent=1 // pred_fallthru
      _
    // Predicated region
    $region18: #{tpu_custom_call.1} parent=1 // pred_check
      _
    $region19: #{tpu_custom_call.1} parent=1 // pred_check_branch
      %39 = sbr.rel (0) target = $region21
    $region20: #{tpu_custom_call.1} parent=1 // pred_region
      %40 = dma.done [#allocation3], 11264
    $region21: #{tpu_custom_call.1} parent=1 // pred_fallthru
      _
    // Predicated region
    $region22: #{tpu_custom_call.1} parent=1 // pred_check
      _
    $region23: #{tpu_custom_call.1} parent=1 // pred_check_branch
      %42 = sbr.rel (0) target = $region25
    $region24: #{tpu_custom_call.1} parent=1 // pred_region
      %43 = dma.done [#allocation6], 768
    $region25: #{tpu_custom_call.1} parent=1 // pred_fallthru
      _
    %v44 = vld [vmem:[%s0] sm:$0xff]
    %v45 = vld [vmem:[#allocation2] sm:$0xff]
    %v46 = vld [vmem:[#allocation2 + $0x8] sm:$0xff]
    %v47 = vld [vmem:[#allocation2 + $0x10] sm:$0xff]
    %v48 = vld [vmem:[#allocation2 + $0x18] sm:$0xff]
    %v49 = vld [vmem:[#allocation2 + $0x20] sm:$0xff]
    %v50 = vld [vmem:[#allocation2 + $0x28] sm:$0xff]
    %v51 = vld [vmem:[#allocation2 + $0x30] sm:$0xff]
    %v52 = vld [vmem:[#allocation2 + $0x38] sm:$0xff]
    %v53 = vld [vmem:[#allocation5] ss:$0 sm:$0xff]
    %vm54 = vcmask 523264
    %v56 = vsel %vm54, %v44, 0
    %58 = vmatprep.subr.mxu0 0.0
    %59 = vmatpush1.msra.mxu0 %v45
    %60 = vmatprep.subr.mxu0 0.0
    %61 = vmatpush1.msra.mxu0 %v46
    %62 = vmatprep.subr.mxu0 0.0
    %63 = vmatpush1.msra.mxu0 %v47
    %64 = vmatprep.subr.mxu0 0.0
    %65 = vmatpush1.msra.mxu0 %v48
    %66 = vmatprep.subr.mxu0 0.0
    %67 = vmatpush1.msra.mxu0 %v49
    %68 = vmatprep.subr.mxu0 0.0
    %69 = vmatpush1.msra.mxu0 %v50
    %70 = vmatprep.subr.mxu0 0.0
    %71 = vmatpush1.msra.mxu0 %v51
    %72 = vmatprep.subr.mxu0 0.0
    %73 = vmatpush1.msra.mxu0 %v52
    %74 = vmatprep.subr.mxu0 0.0
    %75 = vmatpush1.msra.mxu0 0.0
    %76 = vmatprep.subr.mxu0 0.0
    %77 = vmatpush1.msra.mxu0 0.0
    %78 = vmatprep.subr.mxu0 0.0
    %79 = vmatpush1.msra.mxu0 0.0
    %80 = vmatprep.subr.mxu0 0.0
    %81 = vmatpush1.msra.mxu0 0.0
    %82 = vmatprep.subr.mxu0 0.0
    %83 = vmatpush1.msra.mxu0 0.0
    %84 = vmatprep.subr.mxu0 0.0
    %85 = vmatpush1.msra.mxu0 0.0
    %86 = vmatprep.subr.mxu0 0.0
    %87 = vmatpush1.msra.mxu0 0.0
    %88 = vmatprep.subr.mxu0 0.0
    %89 = vmatpush1.msra.mxu0 0.0
    %90 = vmatprep.subr.mxu0 0.0
    %91 = vmatpush1.msra.mxu0 0.0
    %92 = vmatprep.subr.mxu0 0.0
    %93 = vmatpush1.msra.mxu0 0.0
    %94 = vmatprep.subr.mxu0 0.0
    %95 = vmatpush1.msra.mxu0 0.0
    %96 = vmatprep.subr.mxu0 0.0
    %97 = vmatpush1.msra.mxu0 0.0
    %98 = vmatprep.subr.mxu0 0.0
    %99 = vmatpush1.msra.mxu0 0.0
    %100 = vmatprep.subr.mxu0 0.0
    %101 = vmatpush1.msra.mxu0 0.0
    %102 = vmatprep.subr.mxu0 0.0
    %103 = vmatpush1.msra.mxu0 0.0
    %104 = vmatprep.subr.mxu0 0.0
    %105 = vmatpush1.msra.mxu0 0.0
    %106 = vmatprep.subr.mxu0 0.0
    %107 = vmatpush1.msra.mxu0 0.0
    %108 = vmatprep.subr.mxu0 0.0
    %109 = vmatpush1.msra.mxu0 0.0
    %110 = vmatprep.subr.mxu0 0.0
    %111 = vmatpush1.msra.mxu0 0.0
    %112 = vmatprep.subr.mxu0 0.0
    %113 = vmatpush1.msra.mxu0 0.0
    %114 = vmatprep.subr.mxu0 0.0
    %115 = vmatpush1.msra.mxu0 0.0
    %116 = vmatprep.subr.mxu0 0.0
    %117 = vmatpush1.msra.mxu0 0.0
    %118 = vmatprep.subr.mxu0 0.0
    %119 = vmatpush1.msra.mxu0 0.0
    %120 = vmatprep.subr.mxu0 0.0
    %121 = vmatpush1.msra.mxu0 0.0
    %122 = vmatprep.mubr.f32.mxu0 0.0
    %123 = vmatmul.mubr.f32.gmra.mrb[0].mxu0 %v56
    %v124 = vpop.f32.mrb[0].mxu0
    %v125 = vadd.f32 %v53, %v124
    %v126 = vpop.f32.mrb[0].mxu0
    %127 = vdwg.mxu0
    %vm128 = vcmp.gt.f32.partialorder %v125, 0.0
    %v129 = vmul.f32 %v125, 0.2
    %v130 = vsel %vm128, %v125, %v129
    %v131 = vld [vmem:[#allocation2 + $0x40] sm:$0xff]
    %v132 = vld [vmem:[#allocation2 + $0x48] sm:$0xff]
    %v133 = vld [vmem:[#allocation2 + $0x50] sm:$0xff]
    %v134 = vld [vmem:[#allocation2 + $0x58] sm:$0xff]
    %v135 = vld [vmem:[#allocation2 + $0x60] sm:$0xff]
    %v136 = vld [vmem:[#allocation2 + $0x68] sm:$0xff]
    %v137 = vld [vmem:[#allocation2 + $0x70] sm:$0xff]
    %v138 = vld [vmem:[#allocation2 + $0x78] sm:$0xff]
    %v139 = vld [vmem:[#allocation2 + $0x80] sm:$0xff]
    %v140 = vld [vmem:[#allocation2 + $0x88] sm:$0xff]
    %v141 = vld [vmem:[#allocation2 + $0x90] sm:$0xff]
    %v142 = vld [vmem:[#allocation2 + $0x98] sm:$0xff]
    %v143 = vld [vmem:[#allocation2 + $0xa0] sm:$0xff]
    %v144 = vld [vmem:[#allocation2 + $0xa8] sm:$0xff]
    %v145 = vld [vmem:[#allocation2 + $0xb0] sm:$0xff]
    %v146 = vld [vmem:[#allocation2 + $0xb8] sm:$0xff]
    %v147 = vld [vmem:[#allocation5 + $0x8] ss:$0 sm:$0xff]
    %148 = vmatprep.subr.mxu0 0.0
    %149 = vmatpush1.msra.mxu0 %v131
    %150 = vmatprep.subr.mxu0 0.0
    %151 = vmatpush1.msra.mxu0 %v132
    %152 = vmatprep.subr.mxu0 0.0
    %153 = vmatpush1.msra.mxu0 %v133
    %154 = vmatprep.subr.mxu0 0.0
    %155 = vmatpush1.msra.mxu0 %v134
    %156 = vmatprep.subr.mxu0 0.0
    %157 = vmatpush1.msra.mxu0 %v135
    %158 = vmatprep.subr.mxu0 0.0
    %159 = vmatpush1.msra.mxu0 %v136
    %160 = vmatprep.subr.mxu0 0.0
    %161 = vmatpush1.msra.mxu0 %v137
    %162 = vmatprep.subr.mxu0 0.0
    %163 = vmatpush1.msra.mxu0 %v138
    %164 = vmatprep.subr.mxu0 0.0
    %165 = vmatpush1.msra.mxu0 %v139
    %166 = vmatprep.subr.mxu0 0.0
    %167 = vmatpush1.msra.mxu0 %v140
    %168 = vmatprep.subr.mxu0 0.0
    %169 = vmatpush1.msra.mxu0 %v141
    %170 = vmatprep.subr.mxu0 0.0
    %171 = vmatpush1.msra.mxu0 %v142
    %172 = vmatprep.subr.mxu0 0.0
    %173 = vmatpush1.msra.mxu0 %v143
    %174 = vmatprep.subr.mxu0 0.0
    %175 = vmatpush1.msra.mxu0 %v144
    %176 = vmatprep.subr.mxu0 0.0
    %177 = vmatpush1.msra.mxu0 %v145
    %178 = vmatprep.subr.mxu0 0.0
    %179 = vmatpush1.msra.mxu0 %v146
    %180 = vmatprep.subr.mxu0 0.0
    %181 = vmatpush1.msra.mxu0 0.0
    %182 = vmatprep.subr.mxu0 0.0
    %183 = vmatpush1.msra.mxu0 0.0
    %184 = vmatprep.subr.mxu0 0.0
    %185 = vmatpush1.msra.mxu0 0.0
    %186 = vmatprep.subr.mxu0 0.0
    %187 = vmatpush1.msra.mxu0 0.0
    %188 = vmatprep.subr.mxu0 0.0
    %189 = vmatpush1.msra.mxu0 0.0
    %190 = vmatprep.subr.mxu0 0.0
    %191 = vmatpush1.msra.mxu0 0.0
    %192 = vmatprep.subr.mxu0 0.0
    %193 = vmatpush1.msra.mxu0 0.0
    %194 = vmatprep.subr.mxu0 0.0
    %195 = vmatpush1.msra.mxu0 0.0
    %196 = vmatprep.subr.mxu0 0.0
    %197 = vmatpush1.msra.mxu0 0.0
    %198 = vmatprep.subr.mxu0 0.0
    %199 = vmatpush1.msra.mxu0 0.0
    %200 = vmatprep.subr.mxu0 0.0
    %201 = vmatpush1.msra.mxu0 0.0
    %202 = vmatprep.subr.mxu0 0.0
    %203 = vmatpush1.msra.mxu0 0.0
    %204 = vmatprep.subr.mxu0 0.0
    %205 = vmatpush1.msra.mxu0 0.0
    %206 = vmatprep.subr.mxu0 0.0
    %207 = vmatpush1.msra.mxu0 0.0
    %208 = vmatprep.subr.mxu0 0.0
    %209 = vmatpush1.msra.mxu0 0.0
    %210 = vmatprep.subr.mxu0 0.0
    %211 = vmatpush1.msra.mxu0 0.0
    %212 = vmatprep.mubr.f32.mxu0 0.0
    %213 = vmatmul.mubr.f32.gmra.mrb[0].mxu0 %v130
    %v214 = vpop.f32.mrb[0].mxu0
    %v215 = vadd.f32 %v147, %v214
    %v216 = vpop.f32.mrb[0].mxu0
    %217 = vdwg.mxu0
    %vm218 = vcmp.gt.f32.partialorder %v215, 0.0
    %v219 = vmul.f32 %v215, 0.2
    %v220 = vsel %vm218, %v215, %v219
    %v221 = vld [vmem:[#allocation2 + $0xc0] sm:$0xff]
    %v222 = vld [vmem:[#allocation2 + $0xc8] sm:$0xff]
    %v223 = vld [vmem:[#allocation2 + $0xd0] sm:$0xff]
    %v224 = vld [vmem:[#allocation2 + $0xd8] sm:$0xff]
    %v225 = vld [vmem:[#allocation2 + $0xe0] sm:$0xff]
    %v226 = vld [vmem:[#allocation2 + $0xe8] sm:$0xff]
    %v227 = vld [vmem:[#allocation2 + $0xf0] sm:$0xff]
    %v228 = vld [vmem:[#allocation2 + $0xf8] sm:$0xff]
    %v229 = vld [vmem:[#allocation2 + $0x100] sm:$0xff]
    %v230 = vld [vmem:[#allocation2 + $0x108] sm:$0xff]
    %v231 = vld [vmem:[#allocation2 + $0x110] sm:$0xff]
    %v232 = vld [vmem:[#allocation2 + $0x118] sm:$0xff]
    %v233 = vld [vmem:[#allocation2 + $0x120] sm:$0xff]
    %v234 = vld [vmem:[#allocation2 + $0x128] sm:$0xff]
    %v235 = vld [vmem:[#allocation2 + $0x130] sm:$0xff]
    %v236 = vld [vmem:[#allocation2 + $0x138] sm:$0xff]
    %v237 = vld [vmem:[#allocation5 + $0x10] ss:$0 sm:$0xff]
    %238 = vmatprep.subr.mxu0 0.0
    %239 = vmatpush1.msra.mxu0 %v221
    %240 = vmatprep.subr.mxu0 0.0
    %241 = vmatpush1.msra.mxu0 %v222
    %242 = vmatprep.subr.mxu0 0.0
    %243 = vmatpush1.msra.mxu0 %v223
    %244 = vmatprep.subr.mxu0 0.0
    %245 = vmatpush1.msra.mxu0 %v224
    %246 = vmatprep.subr.mxu0 0.0
    %247 = vmatpush1.msra.mxu0 %v225
    %248 = vmatprep.subr.mxu0 0.0
    %249 = vmatpush1.msra.mxu0 %v226
    %250 = vmatprep.subr.mxu0 0.0
    %251 = vmatpush1.msra.mxu0 %v227
    %252 = vmatprep.subr.mxu0 0.0
    %253 = vmatpush1.msra.mxu0 %v228
    %254 = vmatprep.subr.mxu0 0.0
    %255 = vmatpush1.msra.mxu0 %v229
    %256 = vmatprep.subr.mxu0 0.0
    %257 = vmatpush1.msra.mxu0 %v230
    %258 = vmatprep.subr.mxu0 0.0
    %259 = vmatpush1.msra.mxu0 %v231
    %260 = vmatprep.subr.mxu0 0.0
    %261 = vmatpush1.msra.mxu0 %v232
    %262 = vmatprep.subr.mxu0 0.0
    %263 = vmatpush1.msra.mxu0 %v233
    %264 = vmatprep.subr.mxu0 0.0
    %265 = vmatpush1.msra.mxu0 %v234
    %266 = vmatprep.subr.mxu0 0.0
    %267 = vmatpush1.msra.mxu0 %v235
    %268 = vmatprep.subr.mxu0 0.0
    %269 = vmatpush1.msra.mxu0 %v236
    %270 = vmatprep.subr.mxu0 0.0
    %271 = vmatpush1.msra.mxu0 0.0
    %272 = vmatprep.subr.mxu0 0.0
    %273 = vmatpush1.msra.mxu0 0.0
    %274 = vmatprep.subr.mxu0 0.0
    %275 = vmatpush1.msra.mxu0 0.0
    %276 = vmatprep.subr.mxu0 0.0
    %277 = vmatpush1.msra.mxu0 0.0
    %278 = vmatprep.subr.mxu0 0.0
    %279 = vmatpush1.msra.mxu0 0.0
    %280 = vmatprep.subr.mxu0 0.0
    %281 = vmatpush1.msra.mxu0 0.0
    %282 = vmatprep.subr.mxu0 0.0
    %283 = vmatpush1.msra.mxu0 0.0
    %284 = vmatprep.subr.mxu0 0.0
    %285 = vmatpush1.msra.mxu0 0.0
    %286 = vmatprep.subr.mxu0 0.0
    %287 = vmatpush1.msra.mxu0 0.0
    %288 = vmatprep.subr.mxu0 0.0
    %289 = vmatpush1.msra.mxu0 0.0
    %290 = vmatprep.subr.mxu0 0.0
    %291 = vmatpush1.msra.mxu0 0.0
    %292 = vmatprep.subr.mxu0 0.0
    %293 = vmatpush1.msra.mxu0 0.0
    %294 = vmatprep.subr.mxu0 0.0
    %295 = vmatpush1.msra.mxu0 0.0
    %296 = vmatprep.subr.mxu0 0.0
    %297 = vmatpush1.msra.mxu0 0.0
    %298 = vmatprep.subr.mxu0 0.0
    %299 = vmatpush1.msra.mxu0 0.0
    %300 = vmatprep.subr.mxu0 0.0
    %301 = vmatpush1.msra.mxu0 0.0
    %302 = vmatprep.mubr.f32.mxu0 0.0
    %303 = vmatmul.mubr.f32.gmra.mrb[0].mxu0 %v220
    %v304 = vpop.f32.mrb[0].mxu0
    %v305 = vadd.f32 %v237, %v304
    %v306 = vpop.f32.mrb[0].mxu0
    %307 = vdwg.mxu0
    %v308 = vld [vmem:[%s1] sm:$0xff]
    %310 = vrot.lane.b32.xlu0 %v308, 2
    %v311 = vpop.permute.xlu0 %310
    %v313 = vmul.f32 %v305, %v311
    %315 = vrot.lane.b32.xlu0 %v313, 126
    %v316 = vpop.permute.xlu0 %315
    %v318 = vadd.f32 %v305, %v316
    %vm319 = vcmask 15360
    %v320 = vsel %vm319, %v318, 0.0
    %v321 = vld [vmem:[#allocation2 + $0x140] sm:$0xff]
    %v322 = vld [vmem:[#allocation2 + $0x148] sm:$0xff]
    %v323 = vld [vmem:[#allocation2 + $0x150] sm:$0xff]
    %v324 = vld [vmem:[#allocation2 + $0x158] sm:$0xff]
    %v325 = vld [vmem:[#allocation2 + $0x160] sm:$0xff]
    %v326 = vld [vmem:[#allocation2 + $0x168] sm:$0xff]
    %v327 = vld [vmem:[#allocation2 + $0x170] sm:$0xff]
    %v328 = vld [vmem:[#allocation2 + $0x178] sm:$0xff]
    %v329 = vld [vmem:[#allocation2 + $0x180] sm:$0xff]
    %v330 = vld [vmem:[#allocation2 + $0x188] sm:$0xff]
    %v331 = vld [vmem:[#allocation2 + $0x190] sm:$0xff]
    %v332 = vld [vmem:[#allocation2 + $0x198] sm:$0xff]
    %v333 = vld [vmem:[#allocation2 + $0x1a0] sm:$0xff]
    %v334 = vld [vmem:[#allocation2 + $0x1a8] sm:$0xff]
    %v335 = vld [vmem:[#allocation2 + $0x1b0] sm:$0xff]
    %v336 = vld [vmem:[#allocation2 + $0x1b8] sm:$0xff]
    %v337 = vld [vmem:[#allocation5 + $0x18] ss:$0 sm:$0xff]
    %338 = vmatprep.subr.mxu0 0.0
    %339 = vmatpush1.msra.mxu0 %v321
    %340 = vmatprep.subr.mxu0 0.0
    %341 = vmatpush1.msra.mxu0 %v322
    %342 = vmatprep.subr.mxu0 0.0
    %343 = vmatpush1.msra.mxu0 %v323
    %344 = vmatprep.subr.mxu0 0.0
    %345 = vmatpush1.msra.mxu0 %v324
    %346 = vmatprep.subr.mxu0 0.0
    %347 = vmatpush1.msra.mxu0 %v325
    %348 = vmatprep.subr.mxu0 0.0
    %349 = vmatpush1.msra.mxu0 %v326
    %350 = vmatprep.subr.mxu0 0.0
    %351 = vmatpush1.msra.mxu0 %v327
    %352 = vmatprep.subr.mxu0 0.0
    %353 = vmatpush1.msra.mxu0 %v328
    %354 = vmatprep.subr.mxu0 0.0
    %355 = vmatpush1.msra.mxu0 %v329
    %356 = vmatprep.subr.mxu0 0.0
    %357 = vmatpush1.msra.mxu0 %v330
    %358 = vmatprep.subr.mxu0 0.0
    %359 = vmatpush1.msra.mxu0 %v331
    %360 = vmatprep.subr.mxu0 0.0
    %361 = vmatpush1.msra.mxu0 %v332
    %362 = vmatprep.subr.mxu0 0.0
    %363 = vmatpush1.msra.mxu0 %v333
    %364 = vmatprep.subr.mxu0 0.0
    %365 = vmatpush1.msra.mxu0 %v334
    %366 = vmatprep.subr.mxu0 0.0
    %367 = vmatpush1.msra.mxu0 %v335
    %368 = vmatprep.subr.mxu0 0.0
    %369 = vmatpush1.msra.mxu0 %v336
    %370 = vmatprep.subr.mxu0 0.0
    %371 = vmatpush1.msra.mxu0 0.0
    %372 = vmatprep.subr.mxu0 0.0
    %373 = vmatpush1.msra.mxu0 0.0
    %374 = vmatprep.subr.mxu0 0.0
    %375 = vmatpush1.msra.mxu0 0.0
    %376 = vmatprep.subr.mxu0 0.0
    %377 = vmatpush1.msra.mxu0 0.0
    %378 = vmatprep.subr.mxu0 0.0
    %379 = vmatpush1.msra.mxu0 0.0
    %380 = vmatprep.subr.mxu0 0.0
    %381 = vmatpush1.msra.mxu0 0.0
    %382 = vmatprep.subr.mxu0 0.0
    %383 = vmatpush1.msra.mxu0 0.0
    %384 = vmatprep.subr.mxu0 0.0
    %385 = vmatpush1.msra.mxu0 0.0
    %386 = vmatprep.subr.mxu0 0.0
    %387 = vmatpush1.msra.mxu0 0.0
    %388 = vmatprep.subr.mxu0 0.0
    %389 = vmatpush1.msra.mxu0 0.0
    %390 = vmatprep.subr.mxu0 0.0
    %391 = vmatpush1.msra.mxu0 0.0
    %392 = vmatprep.subr.mxu0 0.0
    %393 = vmatpush1.msra.mxu0 0.0
    %394 = vmatprep.subr.mxu0 0.0
    %395 = vmatpush1.msra.mxu0 0.0
    %396 = vmatprep.subr.mxu0 0.0
    %397 = vmatpush1.msra.mxu0 0.0
    %398 = vmatprep.subr.mxu0 0.0
    %399 = vmatpush1.msra.mxu0 0.0
    %400 = vmatprep.subr.mxu0 0.0
    %401 = vmatpush1.msra.mxu0 0.0
    %402 = vmatprep.mubr.f32.mxu0 0.0
    %403 = vmatmul.mubr.f32.gmra.mrb[0].mxu0 %v320
    %v404 = vpop.f32.mrb[0].mxu0
    %v405 = vadd.f32 %v337, %v404
    %v406 = vpop.f32.mrb[0].mxu0
    %407 = vdwg.mxu0
    %vm408 = vcmp.gt.f32.partialorder %v405, 0.0
    %v409 = vmul.f32 %v405, 0.2
    %v410 = vsel %vm408, %v405, %v409
    %v411 = vld [vmem:[#allocation2 + $0x1c0] sm:$0xff]
    %v412 = vld [vmem:[#allocation2 + $0x1c8] sm:$0xff]
    %v413 = vld [vmem:[#allocation2 + $0x1d0] sm:$0xff]
    %v414 = vld [vmem:[#allocation2 + $0x1d8] sm:$0xff]
    %v415 = vld [vmem:[#allocation2 + $0x1e0] sm:$0xff]
    %v416 = vld [vmem:[#allocation2 + $0x1e8] sm:$0xff]
    %v417 = vld [vmem:[#allocation2 + $0x1f0] sm:$0xff]
    %v418 = vld [vmem:[#allocation2 + $0x1f8] sm:$0xff]
    %v419 = vld [vmem:[#allocation2 + $0x200] sm:$0xff]
    %v420 = vld [vmem:[#allocation2 + $0x208] sm:$0xff]
    %v421 = vld [vmem:[#allocation2 + $0x210] sm:$0xff]
    %v422 = vld [vmem:[#allocation2 + $0x218] sm:$0xff]
    %v423 = vld [vmem:[#allocation2 + $0x220] sm:$0xff]
    %v424 = vld [vmem:[#allocation2 + $0x228] sm:$0xff]
    %v425 = vld [vmem:[#allocation2 + $0x230] sm:$0xff]
    %v426 = vld [vmem:[#allocation2 + $0x238] sm:$0xff]
    %v427 = vld [vmem:[#allocation5 + $0x20] ss:$0 sm:$0xff]
    %428 = vmatprep.subr.mxu0 0.0
    %429 = vmatpush1.msra.mxu0 %v411
    %430 = vmatprep.subr.mxu0 0.0
    %431 = vmatpush1.msra.mxu0 %v412
    %432 = vmatprep.subr.mxu0 0.0
    %433 = vmatpush1.msra.mxu0 %v413
    %434 = vmatprep.subr.mxu0 0.0
    %435 = vmatpush1.msra.mxu0 %v414
    %436 = vmatprep.subr.mxu0 0.0
    %437 = vmatpush1.msra.mxu0 %v415
    %438 = vmatprep.subr.mxu0 0.0
    %439 = vmatpush1.msra.mxu0 %v416
    %440 = vmatprep.subr.mxu0 0.0
    %441 = vmatpush1.msra.mxu0 %v417
    %442 = vmatprep.subr.mxu0 0.0
    %443 = vmatpush1.msra.mxu0 %v418
    %444 = vmatprep.subr.mxu0 0.0
    %445 = vmatpush1.msra.mxu0 %v419
    %446 = vmatprep.subr.mxu0 0.0
    %447 = vmatpush1.msra.mxu0 %v420
    %448 = vmatprep.subr.mxu0 0.0
    %449 = vmatpush1.msra.mxu0 %v421
    %450 = vmatprep.subr.mxu0 0.0
    %451 = vmatpush1.msra.mxu0 %v422
    %452 = vmatprep.subr.mxu0 0.0
    %453 = vmatpush1.msra.mxu0 %v423
    %454 = vmatprep.subr.mxu0 0.0
    %455 = vmatpush1.msra.mxu0 %v424
    %456 = vmatprep.subr.mxu0 0.0
    %457 = vmatpush1.msra.mxu0 %v425
    %458 = vmatprep.subr.mxu0 0.0
    %459 = vmatpush1.msra.mxu0 %v426
    %460 = vmatprep.subr.mxu0 0.0
    %461 = vmatpush1.msra.mxu0 0.0
    %462 = vmatprep.subr.mxu0 0.0
    %463 = vmatpush1.msra.mxu0 0.0
    %464 = vmatprep.subr.mxu0 0.0
    %465 = vmatpush1.msra.mxu0 0.0
    %466 = vmatprep.subr.mxu0 0.0
    %467 = vmatpush1.msra.mxu0 0.0
    %468 = vmatprep.subr.mxu0 0.0
    %469 = vmatpush1.msra.mxu0 0.0
    %470 = vmatprep.subr.mxu0 0.0
    %471 = vmatpush1.msra.mxu0 0.0
    %472 = vmatprep.subr.mxu0 0.0
    %473 = vmatpush1.msra.mxu0 0.0
    %474 = vmatprep.subr.mxu0 0.0
    %475 = vmatpush1.msra.mxu0 0.0
    %476 = vmatprep.subr.mxu0 0.0
    %477 = vmatpush1.msra.mxu0 0.0
    %478 = vmatprep.subr.mxu0 0.0
    %479 = vmatpush1.msra.mxu0 0.0
    %480 = vmatprep.subr.mxu0 0.0
    %481 = vmatpush1.msra.mxu0 0.0
    %482 = vmatprep.subr.mxu0 0.0
    %483 = vmatpush1.msra.mxu0 0.0
    %484 = vmatprep.subr.mxu0 0.0
    %485 = vmatpush1.msra.mxu0 0.0
    %486 = vmatprep.subr.mxu0 0.0
    %487 = vmatpush1.msra.mxu0 0.0
    %488 = vmatprep.subr.mxu0 0.0
    %489 = vmatpush1.msra.mxu0 0.0
    %490 = vmatprep.subr.mxu0 0.0
    %491 = vmatpush1.msra.mxu0 0.0
    %492 = vmatprep.mubr.f32.mxu0 0.0
    %493 = vmatmul.mubr.f32.gmra.mrb[0].mxu0 %v410
    %v494 = vpop.f32.mrb[0].mxu0
    %v495 = vadd.f32 %v427, %v494
    %v496 = vpop.f32.mrb[0].mxu0
    %497 = vdwg.mxu0
    %vm498 = vcmp.gt.f32.partialorder %v495, 0.0
    %v499 = vmul.f32 %v495, 0.2
    %v500 = vsel %vm498, %v495, %v499
    %v501 = vld [vmem:[#allocation2 + $0x240] sm:$0xff]
    %v502 = vld [vmem:[#allocation2 + $0x248] sm:$0xff]
    %v503 = vld [vmem:[#allocation2 + $0x250] sm:$0xff]
    %v504 = vld [vmem:[#allocation2 + $0x258] sm:$0xff]
    %v505 = vld [vmem:[#allocation2 + $0x260] sm:$0xff]
    %v506 = vld [vmem:[#allocation2 + $0x268] sm:$0xff]
    %v507 = vld [vmem:[#allocation2 + $0x270] sm:$0xff]
    %v508 = vld [vmem:[#allocation2 + $0x278] sm:$0xff]
    %v509 = vld [vmem:[#allocation2 + $0x280] sm:$0xff]
    %v510 = vld [vmem:[#allocation2 + $0x288] sm:$0xff]
    %v511 = vld [vmem:[#allocation2 + $0x290] sm:$0xff]
    %v512 = vld [vmem:[#allocation2 + $0x298] sm:$0xff]
    %v513 = vld [vmem:[#allocation2 + $0x2a0] sm:$0xff]
    %v514 = vld [vmem:[#allocation2 + $0x2a8] sm:$0xff]
    %v515 = vld [vmem:[#allocation2 + $0x2b0] sm:$0xff]
    %v516 = vld [vmem:[#allocation2 + $0x2b8] sm:$0xff]
    %v517 = vld [vmem:[#allocation5 + $0x28] ss:$0 sm:$0xff]
    %518 = vmatprep.subr.mxu0 0.0
    %519 = vmatpush1.msra.mxu0 %v501
    %520 = vmatprep.subr.mxu0 0.0
    %521 = vmatpush1.msra.mxu0 %v502
    %522 = vmatprep.subr.mxu0 0.0
    %523 = vmatpush1.msra.mxu0 %v503
    %524 = vmatprep.subr.mxu0 0.0
    %525 = vmatpush1.msra.mxu0 %v504
    %526 = vmatprep.subr.mxu0 0.0
    %527 = vmatpush1.msra.mxu0 %v505
    %528 = vmatprep.subr.mxu0 0.0
    %529 = vmatpush1.msra.mxu0 %v506
    %530 = vmatprep.subr.mxu0 0.0
    %531 = vmatpush1.msra.mxu0 %v507
    %532 = vmatprep.subr.mxu0 0.0
    %533 = vmatpush1.msra.mxu0 %v508
    %534 = vmatprep.subr.mxu0 0.0
    %535 = vmatpush1.msra.mxu0 %v509
    %536 = vmatprep.subr.mxu0 0.0
    %537 = vmatpush1.msra.mxu0 %v510
    %538 = vmatprep.subr.mxu0 0.0
    %539 = vmatpush1.msra.mxu0 %v511
    %540 = vmatprep.subr.mxu0 0.0
    %541 = vmatpush1.msra.mxu0 %v512
    %542 = vmatprep.subr.mxu0 0.0
    %543 = vmatpush1.msra.mxu0 %v513
    %544 = vmatprep.subr.mxu0 0.0
    %545 = vmatpush1.msra.mxu0 %v514
    %546 = vmatprep.subr.mxu0 0.0
    %547 = vmatpush1.msra.mxu0 %v515
    %548 = vmatprep.subr.mxu0 0.0
    %549 = vmatpush1.msra.mxu0 %v516
    %550 = vmatprep.subr.mxu0 0.0
    %551 = vmatpush1.msra.mxu0 0.0
    %552 = vmatprep.subr.mxu0 0.0
    %553 = vmatpush1.msra.mxu0 0.0
    %554 = vmatprep.subr.mxu0 0.0
    %555 = vmatpush1.msra.mxu0 0.0
    %556 = vmatprep.subr.mxu0 0.0
    %557 = vmatpush1.msra.mxu0 0.0
    %558 = vmatprep.subr.mxu0 0.0
    %559 = vmatpush1.msra.mxu0 0.0
    %560 = vmatprep.subr.mxu0 0.0
    %561 = vmatpush1.msra.mxu0 0.0
    %562 = vmatprep.subr.mxu0 0.0
    %563 = vmatpush1.msra.mxu0 0.0
    %564 = vmatprep.subr.mxu0 0.0
    %565 = vmatpush1.msra.mxu0 0.0
    %566 = vmatprep.subr.mxu0 0.0
    %567 = vmatpush1.msra.mxu0 0.0
    %568 = vmatprep.subr.mxu0 0.0
    %569 = vmatpush1.msra.mxu0 0.0
    %570 = vmatprep.subr.mxu0 0.0
    %571 = vmatpush1.msra.mxu0 0.0
    %572 = vmatprep.subr.mxu0 0.0
    %573 = vmatpush1.msra.mxu0 0.0
    %574 = vmatprep.subr.mxu0 0.0
    %575 = vmatpush1.msra.mxu0 0.0
    %576 = vmatprep.subr.mxu0 0.0
    %577 = vmatpush1.msra.mxu0 0.0
    %578 = vmatprep.subr.mxu0 0.0
    %579 = vmatpush1.msra.mxu0 0.0
    %580 = vmatprep.subr.mxu0 0.0
    %581 = vmatpush1.msra.mxu0 0.0
    %582 = vmatprep.mubr.f32.mxu0 0.0
    %583 = vmatmul.mubr.f32.gmra.mrb[0].mxu0 %v500
    %v584 = vpop.f32.mrb[0].mxu0
    %v585 = vadd.f32 %v517, %v584
    %v586 = vpop.f32.mrb[0].mxu0
    %587 = vdwg.mxu0
    %v588 = vxor.u32 %v585, 2147483648
    %v589 = vmul.f32 %v588, 1.442695
    %v590 = vpow.pop %v589
    %v591 = vadd.f32 %v590, 1.0
    %v592 = vrcp.pop %v591
    %v593 = vmul.f32 1.0, %v592
    %595 = vrot.lane.b32.xlu0 %v305, 64
    %v596 = vpop.permute.xlu0 %595
    %v598 = vsel %vm54, %v593, %v596
    %vm599 = vcmask 556032
    %v600 = vsel %vm599, %v598, 0.0
    %601 = vst [vmem:[#allocation7] sm:$0xff] %v600
    // Predicated region
    $region26: #{tpu_custom_call.1} parent=1 // pred_check
      _
    $region27: #{tpu_custom_call.1} parent=1 // pred_check_branch
      %603 = sbr.rel (0) target = $region29
    $region28: #{tpu_custom_call.1} parent=1 // pred_region
      %s605 = ssub.s32 128, 128
      %606 = vsyncadd [#allocation4], %s605
      %s608 = sshll.u32 [#allocation7], 4
      %s609 = int_to_ptr.vmem [resolvable:$true] %s608
      %611 = dma.vmem_to_hbm [thread:$0]  %s609, 128, %s4, [#allocation4]
    $region29: #{tpu_custom_call.1} parent=1 // pred_fallthru
      _
    // Predicated region
    $region30: #{tpu_custom_call.1} parent=1 // pred_check
      _
    $region31: #{tpu_custom_call.1} parent=1 // pred_check_branch
      %613 = sbr.rel (0) target = $region33
    $region32: #{tpu_custom_call.1} parent=1 // pred_region
      %614 = dma.done [#allocation4], 128
    $region33: #{tpu_custom_call.1} parent=1 // pred_fallthru
      _
    %615 = vsyncpa [#allocation3], 1
    %616 = vsyncpa [#allocation6], 1
    %617 = vsyncpa [#allocation4], 1

</llo_original>
